<compile_context>
chip_gen: v5e
topology: v5e:2x2
jax: 0.10.0
libtpu: 0.0.40
codegen_flags: <defaults>
</compile_context>

<pallas_src>
import numpy as np
import jax
import jax.numpy as jnp
from jax.experimental import pallas as pl
from jax.experimental.pallas import tpu as pltpu

# ImageNet normalization constants used by utils_img.normalize_img / unnormalize_img
MEAN = (0.485, 0.456, 0.406)
STD = (0.229, 0.224, 0.225)

# Standard JPEG quantization tables
_Q_LUMA = np.array(
    [[16, 11, 10, 16, 24, 40, 51, 61],
     [12, 12, 14, 19, 26, 58, 60, 55],
     [14, 13, 16, 24, 40, 57, 69, 56],
     [14, 17, 22, 29, 51, 87, 80, 62],
     [18, 22, 37, 56, 68, 109, 103, 77],
     [24, 35, 55, 64, 81, 104, 113, 92],
     [49, 64, 78, 87, 103, 121, 120, 101],
     [72, 92, 95, 98, 112, 100, 103, 99]], dtype=np.float64)

_Q_CHROMA = np.array(
    [[17, 18, 24, 47, 99, 99, 99, 99],
     [18, 21, 26, 66, 99, 99, 99, 99],
     [24, 26, 56, 99, 99, 99, 99, 99],
     [47, 66, 99, 99, 99, 99, 99, 99],
     [99, 99, 99, 99, 99, 99, 99, 99],
     [99, 99, 99, 99, 99, 99, 99, 99],
     [99, 99, 99, 99, 99, 99, 99, 99],
     [99, 99, 99, 99, 99, 99, 99, 99]], dtype=np.float64)

_MAX_ROW_CHUNK = 512  # rows of the packed [n_blocks/2, 128] layout per grid step (~768 KiB/block)


def _quality_scaled_table(table, quality):
    quality = float(np.clip(quality, 1, 100))
    scale = 5000.0 / quality if quality < 50 else 200.0 - 2.0 * quality
    q = np.floor((table * scale + 50.0) / 100.0)
    return np.clip(q, 1.0, 255.0).astype(np.float32)


def _dct8_matrix():
    # D[k, n] = c(k) * cos((2n+1) k pi / 16); orthonormal (D @ D.T = I)
    k = np.arange(8)[:, None].astype(np.float64)
    n = np.arange(8)[None, :].astype(np.float64)
    d = np.cos((2.0 * n + 1.0) * k * np.pi / 16.0)
    c = np.full((8, 1), np.sqrt(2.0 / 8.0))
    c[0, 0] = np.sqrt(1.0 / 8.0)
    return c * d  # float64; cast by callers


def _pick_chunk(nrows):
    """Largest row-chunk <= _MAX_ROW_CHUNK that divides nrows and is a multiple of 8
    (or the whole array when it is small / has no such divisor)."""
    if nrows <= _MAX_ROW_CHUNK:
        return nrows
    for c in range(_MAX_ROW_CHUNK, 7, -8):
        if nrows % c == 0:
            return c
    return nrows


def _diffjpeg_kernel(x_ref, fwd_ref, inv_ref, qy_ref, iqy_ref, qc_ref, iqc_ref, o_ref):
    x = x_ref[0]               # [3, chunk, L] f32; each row holds L/64 flattened 8x8 blocks
    fwd = fwd_ref[...]         # [L, L] bf16  block-diag kron(I, (D (x) D)^T)   (pre-transposed)
    inv = inv_ref[...]         # [L, L] bf16  block-diag kron(I, (D (x) D))
    qy, iqy = qy_ref[...], iqy_ref[...]    # [1, L] f32 (q and 1/q, tiled per 64-lane block)
    qc, iqc = qc_ref[...], iqc_ref[...]

    # clamp_pixel: unnormalize -> clamp to [0, 255] (normalization constants folded into one FMA)
    r = jnp.clip(x[0] * (255.0 * STD[0]) + 255.0 * MEAN[0], 0.0, 255.0)
    g = jnp.clip(x[1] * (255.0 * STD[1]) + 255.0 * MEAN[1], 0.0, 255.0)
    b = jnp.clip(x[2] * (255.0 * STD[2]) + 255.0 * MEAN[2], 0.0, 255.0)

    # RGB -> centered YCbCr (JPEG); the +-128 level shifts on Cb/Cr cancel through the round trip
    yc = 0.299 * r + 0.587 * g + 0.114 * b - 128.0
    cbc = -0.168736 * r - 0.331264 * g + 0.5 * b
    crc = 0.5 * r - 0.418688 * g - 0.081312 * b

    def jpeg_roundtrip(chan, q, iq):
        # per-block 2D DCT (dense 64x64 operator, bf16 MXU, f32 accumulation)
        coeff = jnp.dot(chan.astype(jnp.bfloat16), fwd,
                        preferred_element_type=jnp.float32)
        # quantize / round / dequantize (reciprocal table -> VPU multiply, no EUP divide)
        coeff = jnp.round(coeff * iq) * q
        # per-block inverse DCT
        return jnp.dot(coeff.astype(jnp.bfloat16), inv,
                       preferred_element_type=jnp.float32)

    y2 = jpeg_roundtrip(yc, qy, iqy)
    cb2 = jpeg_roundtrip(cbc, qc, iqc)
    cr2 = jpeg_roundtrip(crc, qc, iqc)

    # centered YCbCr -> RGB pixels, clamp, renormalize (constants folded).
    # Forward value equals x + (img_jpeg - x); detach() only matters for gradients.
    r2 = jnp.clip(y2 + 1.402 * cr2 + 128.0, 0.0, 255.0)
    g2 = jnp.clip(y2 - 0.344136 * cb2 - 0.714136 * cr2 + 128.0, 0.0, 255.0)
    b2 = jnp.clip(y2 + 1.772 * cb2 + 128.0, 0.0, 255.0)

    o_ref[0, 0, :, :] = r2 * (1.0 / (255.0 * STD[0])) - MEAN[0] / STD[0]
    o_ref[0, 1, :, :] = g2 * (1.0 / (255.0 * STD[1])) - MEAN[1] / STD[1]
    o_ref[0, 2, :, :] = b2 * (1.0 / (255.0 * STD[2])) - MEAN[2] / STD[2]


def diff_jpeg(x, quality=50):
    """x: [B, 3, H, W] float32 ImageNet-normalized image. H, W multiples of 8."""
    B, C, H, W = x.shape
    assert C == 3 and H % 8 == 0 and W % 8 == 0
    x = x.astype(jnp.float32)

    nb = (H // 8) * (W // 8)              # number of 8x8 blocks per channel
    pack = 2 if nb % 2 == 0 else 1        # pack 2 blocks per 128 lanes when possible
    L = 64 * pack
    nrows = nb // pack
    chunk = _pick_chunk(nrows)

    # Host-side operator / table construction (no in-kernel transposes or divides).
    d8 = _dct8_matrix()                                       # [8,8] float64
    m64 = np.kron(d8, d8)                                     # vec_r(D X D^T) = (D (x) D) vec_r(X)
    op_fwd = jnp.asarray(np.kron(np.eye(pack), m64.T), jnp.bfloat16)   # rows @ op_fwd -> coeffs
    op_inv = jnp.asarray(np.kron(np.eye(pack), m64), jnp.bfloat16)     # rows @ op_inv -> pixels
    qy_np = np.tile(_quality_scaled_table(_Q_LUMA, quality).reshape(-1), pack)
    qc_np = np.tile(_quality_scaled_table(_Q_CHROMA, quality).reshape(-1), pack)
    qy_j = jnp.asarray(qy_np, jnp.float32).reshape(1, L)
    iqy_j = jnp.asarray(1.0 / qy_np, jnp.float32).reshape(1, L)
    qc_j = jnp.asarray(qc_np, jnp.float32).reshape(1, L)
    iqc_j = jnp.asarray(1.0 / qc_np, jnp.float32).reshape(1, L)

    # TODO(synk): the 8x8 space-to-depth shuffle is layout plumbing done by XLA outside the
    # kernel (cheaper there than as in-kernel cross-lane relayouts).
    xb = x.reshape(B, 3, H // 8, 8, W // 8, 8)
    xb = jnp.transpose(xb, (0, 1, 2, 4, 3, 5)).reshape(B, 3, nrows, L)

    flops = 2 * (2 * 3 * B * nrows * L * L) + 60 * B * 3 * H * W
    bytes_accessed = 2 * B * 3 * H * W * 4 + 2 * L * L * 2 + 4 * 4 * L

    ob = pl.pallas_call(
        _diffjpeg_kernel,
        out_shape=jax.ShapeDtypeStruct((B, 3, nrows, L), jnp.float32),
        grid_spec=pltpu.PrefetchScalarGridSpec(
            num_scalar_prefetch=0,
            grid=(B, nrows // chunk),
            in_specs=[
                pl.BlockSpec((1, 3, chunk, L), lambda bi, ri: (bi, 0, ri, 0)),
                pl.BlockSpec((L, L), lambda bi, ri: (0, 0)),
                pl.BlockSpec((L, L), lambda bi, ri: (0, 0)),
                pl.BlockSpec((1, L), lambda bi, ri: (0, 0)),
                pl.BlockSpec((1, L), lambda bi, ri: (0, 0)),
                pl.BlockSpec((1, L), lambda bi, ri: (0, 0)),
                pl.BlockSpec((1, L), lambda bi, ri: (0, 0)),
            ],
            out_specs=pl.BlockSpec((1, 3, chunk, L), lambda bi, ri: (bi, 0, ri, 0)),
        ),
        compiler_params=pltpu.CompilerParams(
            dimension_semantics=("parallel", "parallel")),
        cost_estimate=pl.CostEstimate(
            flops=int(flops), transcendentals=0, bytes_accessed=int(bytes_accessed)),
    )(xb, op_fwd, op_inv, qy_j, iqy_j, qc_j, iqc_j)

    out = ob.reshape(B, 3, H // 8, W // 8, 8, 8)
    out = jnp.transpose(out, (0, 1, 2, 4, 3, 5)).reshape(B, 3, H, W)
    return out


def _reference_diffjpeg(x, quality=50):
    """Pure-jnp f32 reference of the same differentiable-JPEG approximation (sanity check)."""
    B, _, H, W = x.shape
    d8 = jnp.asarray(_dct8_matrix(), jnp.float32)
    qy = jnp.asarray(_quality_scaled_table(_Q_LUMA, quality), jnp.float32)
    qc = jnp.asarray(_quality_scaled_table(_Q_CHROMA, quality), jnp.float32)
    mean = jnp.asarray(MEAN, jnp.float32).reshape(1, 3, 1, 1)
    std = jnp.asarray(STD, jnp.float32).reshape(1, 3, 1, 1)

    pix = jnp.clip((x * std + mean) * 255.0, 0.0, 255.0)
    r, g, b = pix[:, 0], pix[:, 1], pix[:, 2]
    y = 0.299 * r + 0.587 * g + 0.114 * b
    cb = -0.168736 * r - 0.331264 * g + 0.5 * b + 128.0
    cr = 0.5 * r - 0.418688 * g - 0.081312 * b + 128.0

    hi = jax.lax.Precision.HIGHEST

    def roundtrip(chan, q):
        blk = (chan - 128.0).reshape(B, H // 8, 8, W // 8, 8)
        blk = jnp.transpose(blk, (0, 1, 3, 2, 4))                       # [B, hb, wb, 8, 8]
        coeff = jnp.einsum('ui,bhwij,vj->bhwuv', d8, blk, d8, precision=hi)
        coeff = jnp.round(coeff / q) * q
        rec = jnp.einsum('ui,bhwuv,vj->bhwij', d8, coeff, d8, precision=hi)
        rec = jnp.transpose(rec, (0, 1, 3, 2, 4)).reshape(B, H, W)
        return rec + 128.0

    y2, cb2, cr2 = roundtrip(y, qy), roundtrip(cb, qc), roundtrip(cr, qc)
    r2 = y2 + 1.402 * (cr2 - 128.0)
    g2 = y2 - 0.344136 * (cb2 - 128.0) - 0.714136 * (cr2 - 128.0)
    b2 = y2 + 1.772 * (cb2 - 128.0)
    jpg = jnp.clip(jnp.stack([r2, g2, b2], axis=1), 0.0, 255.0) / 255.0
    return (jpg - mean) / std


if __name__ == "__main__":
    key = jax.random.PRNGKey(0)
    B, C, H, W = 2, 3, 16, 16
    # uniform pixels in [0,1], then ImageNet-normalize (matches the module's expected input space)
    pix = jax.random.uniform(key, (B, C, H, W), dtype=jnp.float32)
    mean = jnp.asarray(MEAN, jnp.float32).reshape(1, 3, 1, 1)
    std = jnp.asarray(STD, jnp.float32).reshape(1, 3, 1, 1)
    x = (pix - mean) / std

    out = jax.block_until_ready(diff_jpeg(x, quality=50))
    assert out.shape == (B, C, H, W) and out.dtype == jnp.float32
    assert bool(jnp.all(jnp.isfinite(out)))

    # Coarse sanity check vs. the f32 XLA reference (bf16 MXU matmuls can flip an occasional
    # round() near a quantization boundary, so tolerances are deliberately loose).
    ref = jax.block_until_ready(_reference_diffjpeg(x, quality=50))
    err = jnp.abs(out - ref)
    assert float(jnp.max(err)) < 1.5, float(jnp.max(err))
    assert float(jnp.mean(err)) < 0.1, float(jnp.mean(err))

    print("KERNEL_OK")
</pallas_src>

<mosaic_0001>
module attributes {stable_mosaic.version = 11 : i64} {
  func.func @_diffjpeg_kernel(%arg0: i32, %arg1: i32, %arg2: memref<1x3x2x128xf32, #tpu.memory_space<vmem>>, %arg3: memref<128x128xbf16, #tpu.memory_space<vmem>>, %arg4: memref<128x128xbf16, #tpu.memory_space<vmem>>, %arg5: memref<1x128xf32, #tpu.memory_space<vmem>>, %arg6: memref<1x128xf32, #tpu.memory_space<vmem>>, %arg7: memref<1x128xf32, #tpu.memory_space<vmem>>, %arg8: memref<1x128xf32, #tpu.memory_space<vmem>>, %arg9: memref<1x3x2x128xf32, #tpu.memory_space<vmem>>) attributes {dimension_semantics = [#tpu.dimension_semantics<parallel>, #tpu.dimension_semantics<parallel>], iteration_bounds = array<i64: 2, 1>, scalar_prefetch = 0 : i64, scratch_operands = 0 : i64, tpu.core_type = #tpu.core_type<tc>, window_params = [{transform_indices = @transform_0, window_bounds = array<i64: 1, 3, 2, 128>}, {pipeline_mode = #tpu.pipeline_mode<synchronous>, transform_indices = @transform_1, window_bounds = array<i64: 128, 128>}, {pipeline_mode = #tpu.pipeline_mode<synchronous>, transform_indices = @transform_2, window_bounds = array<i64: 128, 128>}, {pipeline_mode = #tpu.pipeline_mode<synchronous>, transform_indices = @transform_3, window_bounds = array<i64: 1, 128>}, {pipeline_mode = #tpu.pipeline_mode<synchronous>, transform_indices = @transform_4, window_bounds = array<i64: 1, 128>}, {pipeline_mode = #tpu.pipeline_mode<synchronous>, transform_indices = @transform_5, window_bounds = array<i64: 1, 128>}, {pipeline_mode = #tpu.pipeline_mode<synchronous>, transform_indices = @transform_6, window_bounds = array<i64: 1, 128>}, {transform_indices = @transform_7, window_bounds = array<i64: 1, 3, 2, 128>}]} {
    %c0 = arith.constant 0 : index
    %c0_0 = arith.constant 0 : index
    %c0_1 = arith.constant 0 : index
    %c0_2 = arith.constant 0 : index
    %0 = vector.load %arg2[%c0, %c0_0, %c0_1, %c0_2] : memref<1x3x2x128xf32, #tpu.memory_space<vmem>>, vector<1x3x2x128xf32>
    %1 = vector.shape_cast %0 : vector<1x3x2x128xf32> to vector<3x2x128xf32>
    %c0_3 = arith.constant 0 : index
    %c0_4 = arith.constant 0 : index
    %2 = vector.load %arg3[%c0_3, %c0_4] : memref<128x128xbf16, #tpu.memory_space<vmem>>, vector<128x128xbf16>
    %c0_5 = arith.constant 0 : index
    %c0_6 = arith.constant 0 : index
    %3 = vector.load %arg4[%c0_5, %c0_6] : memref<128x128xbf16, #tpu.memory_space<vmem>>, vector<128x128xbf16>
    %c0_7 = arith.constant 0 : index
    %c0_8 = arith.constant 0 : index
    %4 = vector.load %arg5[%c0_7, %c0_8] : memref<1x128xf32, #tpu.memory_space<vmem>>, vector<1x128xf32>
    %c0_9 = arith.constant 0 : index
    %c0_10 = arith.constant 0 : index
    %5 = vector.load %arg6[%c0_9, %c0_10] : memref<1x128xf32, #tpu.memory_space<vmem>>, vector<1x128xf32>
    %c0_11 = arith.constant 0 : index
    %c0_12 = arith.constant 0 : index
    %6 = vector.load %arg7[%c0_11, %c0_12] : memref<1x128xf32, #tpu.memory_space<vmem>>, vector<1x128xf32>
    %c0_13 = arith.constant 0 : index
    %c0_14 = arith.constant 0 : index
    %7 = vector.load %arg8[%c0_13, %c0_14] : memref<1x128xf32, #tpu.memory_space<vmem>>, vector<1x128xf32>
    %8 = vector.extract_strided_slice %1 {offsets = [0, 0, 0], sizes = [1, 2, 128], strides = [1, 1, 1]} : vector<3x2x128xf32> to vector<1x2x128xf32>
    %9 = vector.shape_cast %8 : vector<1x2x128xf32> to vector<2x128xf32>
    %cst = arith.constant 5.839500e+01 : f32
    %10 = vector.broadcast %cst : f32 to vector<2x128xf32>
    %11 = arith.mulf %9, %10 : vector<2x128xf32>
    %cst_15 = arith.constant 1.236750e+02 : f32
    %12 = vector.broadcast %cst_15 : f32 to vector<2x128xf32>
    %13 = arith.addf %11, %12 : vector<2x128xf32>
    %cst_16 = arith.constant 0.000000e+00 : f32
    %cst_17 = arith.constant 2.550000e+02 : f32
    %14 = vector.broadcast %cst_16 : f32 to vector<2x128xf32>
    %15 = arith.maximumf %14, %13 : vector<2x128xf32>
    %16 = vector.broadcast %cst_17 : f32 to vector<2x128xf32>
    %17 = arith.minimumf %16, %15 : vector<2x128xf32>
    %18 = vector.extract_strided_slice %1 {offsets = [1, 0, 0], sizes = [1, 2, 128], strides = [1, 1, 1]} : vector<3x2x128xf32> to vector<1x2x128xf32>
    %19 = vector.shape_cast %18 : vector<1x2x128xf32> to vector<2x128xf32>
    %cst_18 = arith.constant 5.712000e+01 : f32
    %20 = vector.broadcast %cst_18 : f32 to vector<2x128xf32>
    %21 = arith.mulf %19, %20 : vector<2x128xf32>
    %cst_19 = arith.constant 1.162800e+02 : f32
    %22 = vector.broadcast %cst_19 : f32 to vector<2x128xf32>
    %23 = arith.addf %21, %22 : vector<2x128xf32>
    %cst_20 = arith.constant 0.000000e+00 : f32
    %cst_21 = arith.constant 2.550000e+02 : f32
    %24 = vector.broadcast %cst_20 : f32 to vector<2x128xf32>
    %25 = arith.maximumf %24, %23 : vector<2x128xf32>
    %26 = vector.broadcast %cst_21 : f32 to vector<2x128xf32>
    %27 = arith.minimumf %26, %25 : vector<2x128xf32>
    %28 = vector.extract_strided_slice %1 {offsets = [2, 0, 0], sizes = [1, 2, 128], strides = [1, 1, 1]} : vector<3x2x128xf32> to vector<1x2x128xf32>
    %29 = vector.shape_cast %28 : vector<1x2x128xf32> to vector<2x128xf32>
    %cst_22 = arith.constant 5.737500e+01 : f32
    %30 = vector.broadcast %cst_22 : f32 to vector<2x128xf32>
    %31 = arith.mulf %29, %30 : vector<2x128xf32>
    %cst_23 = arith.constant 1.035300e+02 : f32
    %32 = vector.broadcast %cst_23 : f32 to vector<2x128xf32>
    %33 = arith.addf %31, %32 : vector<2x128xf32>
    %cst_24 = arith.constant 0.000000e+00 : f32
    %cst_25 = arith.constant 2.550000e+02 : f32
    %34 = vector.broadcast %cst_24 : f32 to vector<2x128xf32>
    %35 = arith.maximumf %34, %33 : vector<2x128xf32>
    %36 = vector.broadcast %cst_25 : f32 to vector<2x128xf32>
    %37 = arith.minimumf %36, %35 : vector<2x128xf32>
    %cst_26 = arith.constant 2.990000e-01 : f32
    %38 = vector.broadcast %cst_26 : f32 to vector<2x128xf32>
    %39 = arith.mulf %38, %17 : vector<2x128xf32>
    %cst_27 = arith.constant 5.870000e-01 : f32
    %40 = vector.broadcast %cst_27 : f32 to vector<2x128xf32>
    %41 = arith.mulf %40, %27 : vector<2x128xf32>
    %42 = arith.addf %39, %41 : vector<2x128xf32>
    %cst_28 = arith.constant 1.140000e-01 : f32
    %43 = vector.broadcast %cst_28 : f32 to vector<2x128xf32>
    %44 = arith.mulf %43, %37 : vector<2x128xf32>
    %45 = arith.addf %42, %44 : vector<2x128xf32>
    %cst_29 = arith.constant 1.280000e+02 : f32
    %46 = vector.broadcast %cst_29 : f32 to vector<2x128xf32>
    %47 = arith.subf %45, %46 : vector<2x128xf32>
    %cst_30 = arith.constant -1.687360e-01 : f32
    %48 = vector.broadcast %cst_30 : f32 to vector<2x128xf32>
    %49 = arith.mulf %48, %17 : vector<2x128xf32>
    %cst_31 = arith.constant 3.312640e-01 : f32
    %50 = vector.broadcast %cst_31 : f32 to vector<2x128xf32>
    %51 = arith.mulf %50, %27 : vector<2x128xf32>
    %52 = arith.subf %49, %51 : vector<2x128xf32>
    %cst_32 = arith.constant 5.000000e-01 : f32
    %53 = vector.broadcast %cst_32 : f32 to vector<2x128xf32>
    %54 = arith.mulf %53, %37 : vector<2x128xf32>
    %55 = arith.addf %52, %54 : vector<2x128xf32>
    %cst_33 = arith.constant 5.000000e-01 : f32
    %56 = vector.broadcast %cst_33 : f32 to vector<2x128xf32>
    %57 = arith.mulf %56, %17 : vector<2x128xf32>
    %cst_34 = arith.constant 4.186880e-01 : f32
    %58 = vector.broadcast %cst_34 : f32 to vector<2x128xf32>
    %59 = arith.mulf %58, %27 : vector<2x128xf32>
    %60 = arith.subf %57, %59 : vector<2x128xf32>
    %cst_35 = arith.constant 8.131200e-02 : f32
    %61 = vector.broadcast %cst_35 : f32 to vector<2x128xf32>
    %62 = arith.mulf %61, %37 : vector<2x128xf32>
    %63 = arith.subf %60, %62 : vector<2x128xf32>
    %64 = arith.truncf %47 : vector<2x128xf32> to vector<2x128xbf16>
    %cst_36 = arith.constant dense<0.000000e+00> : vector<2x128xf32>
    %65 = tpu.matmul %64, %2, %cst_36 {dimension_numbers = #tpu.dot_dimension_numbers<[1], [0], [0], [1], [0, 0, 1, 1], [], []>} : vector<2x128xbf16>, vector<128x128xbf16>, vector<2x128xf32> -> vector<2x128xf32>
    %66 = vector.broadcast %5 : vector<1x128xf32> to vector<2x128xf32>
    %67 = arith.mulf %65, %66 : vector<2x128xf32>
    %68 = math.roundeven %67 : vector<2x128xf32>
    %69 = vector.broadcast %4 : vector<1x128xf32> to vector<2x128xf32>
    %70 = arith.mulf %68, %69 : vector<2x128xf32>
    %71 = arith.truncf %70 : vector<2x128xf32> to vector<2x128xbf16>
    %cst_37 = arith.constant dense<0.000000e+00> : vector<2x128xf32>
    %72 = tpu.matmul %71, %3, %cst_37 {dimension_numbers = #tpu.dot_dimension_numbers<[1], [0], [0], [1], [0, 0, 1, 1], [], []>} : vector<2x128xbf16>, vector<128x128xbf16>, vector<2x128xf32> -> vector<2x128xf32>
    %73 = arith.truncf %55 : vector<2x128xf32> to vector<2x128xbf16>
    %cst_38 = arith.constant dense<0.000000e+00> : vector<2x128xf32>
    %74 = tpu.matmul %73, %2, %cst_38 {dimension_numbers = #tpu.dot_dimension_numbers<[1], [0], [0], [1], [0, 0, 1, 1], [], []>} : vector<2x128xbf16>, vector<128x128xbf16>, vector<2x128xf32> -> vector<2x128xf32>
    %75 = vector.broadcast %7 : vector<1x128xf32> to vector<2x128xf32>
    %76 = arith.mulf %74, %75 : vector<2x128xf32>
    %77 = math.roundeven %76 : vector<2x128xf32>
    %78 = vector.broadcast %6 : vector<1x128xf32> to vector<2x128xf32>
    %79 = arith.mulf %77, %78 : vector<2x128xf32>
    %80 = arith.truncf %79 : vector<2x128xf32> to vector<2x128xbf16>
    %cst_39 = arith.constant dense<0.000000e+00> : vector<2x128xf32>
    %81 = tpu.matmul %80, %3, %cst_39 {dimension_numbers = #tpu.dot_dimension_numbers<[1], [0], [0], [1], [0, 0, 1, 1], [], []>} : vector<2x128xbf16>, vector<128x128xbf16>, vector<2x128xf32> -> vector<2x128xf32>
    %82 = arith.truncf %63 : vector<2x128xf32> to vector<2x128xbf16>
    %cst_40 = arith.constant dense<0.000000e+00> : vector<2x128xf32>
    %83 = tpu.matmul %82, %2, %cst_40 {dimension_numbers = #tpu.dot_dimension_numbers<[1], [0], [0], [1], [0, 0, 1, 1], [], []>} : vector<2x128xbf16>, vector<128x128xbf16>, vector<2x128xf32> -> vector<2x128xf32>
    %84 = vector.broadcast %7 : vector<1x128xf32> to vector<2x128xf32>
    %85 = arith.mulf %83, %84 : vector<2x128xf32>
    %86 = math.roundeven %85 : vector<2x128xf32>
    %87 = vector.broadcast %6 : vector<1x128xf32> to vector<2x128xf32>
    %88 = arith.mulf %86, %87 : vector<2x128xf32>
    %89 = arith.truncf %88 : vector<2x128xf32> to vector<2x128xbf16>
    %cst_41 = arith.constant dense<0.000000e+00> : vector<2x128xf32>
    %90 = tpu.matmul %89, %3, %cst_41 {dimension_numbers = #tpu.dot_dimension_numbers<[1], [0], [0], [1], [0, 0, 1, 1], [], []>} : vector<2x128xbf16>, vector<128x128xbf16>, vector<2x128xf32> -> vector<2x128xf32>
    %cst_42 = arith.constant 1.402000e+00 : f32
    %91 = vector.broadcast %cst_42 : f32 to vector<2x128xf32>
    %92 = arith.mulf %91, %90 : vector<2x128xf32>
    %93 = arith.addf %72, %92 : vector<2x128xf32>
    %cst_43 = arith.constant 1.280000e+02 : f32
    %94 = vector.broadcast %cst_43 : f32 to vector<2x128xf32>
    %95 = arith.addf %93, %94 : vector<2x128xf32>
    %cst_44 = arith.constant 0.000000e+00 : f32
    %cst_45 = arith.constant 2.550000e+02 : f32
    %96 = vector.broadcast %cst_44 : f32 to vector<2x128xf32>
    %97 = arith.maximumf %96, %95 : vector<2x128xf32>
    %98 = vector.broadcast %cst_45 : f32 to vector<2x128xf32>
    %99 = arith.minimumf %98, %97 : vector<2x128xf32>
    %cst_46 = arith.constant 3.441360e-01 : f32
    %100 = vector.broadcast %cst_46 : f32 to vector<2x128xf32>
    %101 = arith.mulf %100, %81 : vector<2x128xf32>
    %102 = arith.subf %72, %101 : vector<2x128xf32>
    %cst_47 = arith.constant 7.141360e-01 : f32
    %103 = vector.broadcast %cst_47 : f32 to vector<2x128xf32>
    %104 = arith.mulf %103, %90 : vector<2x128xf32>
    %105 = arith.subf %102, %104 : vector<2x128xf32>
    %cst_48 = arith.constant 1.280000e+02 : f32
    %106 = vector.broadcast %cst_48 : f32 to vector<2x128xf32>
    %107 = arith.addf %105, %106 : vector<2x128xf32>
    %cst_49 = arith.constant 0.000000e+00 : f32
    %cst_50 = arith.constant 2.550000e+02 : f32
    %108 = vector.broadcast %cst_49 : f32 to vector<2x128xf32>
    %109 = arith.maximumf %108, %107 : vector<2x128xf32>
    %110 = vector.broadcast %cst_50 : f32 to vector<2x128xf32>
    %111 = arith.minimumf %110, %109 : vector<2x128xf32>
    %cst_51 = arith.constant 1.772000e+00 : f32
    %112 = vector.broadcast %cst_51 : f32 to vector<2x128xf32>
    %113 = arith.mulf %112, %81 : vector<2x128xf32>
    %114 = arith.addf %72, %113 : vector<2x128xf32>
    %cst_52 = arith.constant 1.280000e+02 : f32
    %115 = vector.broadcast %cst_52 : f32 to vector<2x128xf32>
    %116 = arith.addf %114, %115 : vector<2x128xf32>
    %cst_53 = arith.constant 0.000000e+00 : f32
    %cst_54 = arith.constant 2.550000e+02 : f32
    %117 = vector.broadcast %cst_53 : f32 to vector<2x128xf32>
    %118 = arith.maximumf %117, %116 : vector<2x128xf32>
    %119 = vector.broadcast %cst_54 : f32 to vector<2x128xf32>
    %120 = arith.minimumf %119, %118 : vector<2x128xf32>
    %cst_55 = arith.constant 0.0171247534 : f32
    %121 = vector.broadcast %cst_55 : f32 to vector<2x128xf32>
    %122 = arith.mulf %99, %121 : vector<2x128xf32>
    %cst_56 = arith.constant 2.11790395 : f32
    %123 = vector.broadcast %cst_56 : f32 to vector<2x128xf32>
    %124 = arith.subf %122, %123 : vector<2x128xf32>
    %c0_57 = arith.constant 0 : index
    %c0_58 = arith.constant 0 : index
    %c0_59 = arith.constant 0 : index
    %c0_60 = arith.constant 0 : index
    %125 = vector.load %arg9[%c0_57, %c0_58, %c0_59, %c0_60] : memref<1x3x2x128xf32, #tpu.memory_space<vmem>>, vector<1x1x2x128xf32>
    %126 = vector.shape_cast %125 : vector<1x1x2x128xf32> to vector<2x128xf32>
    %127 = vector.shape_cast %124 : vector<2x128xf32> to vector<1x1x2x128xf32>
    tpu.vector_store %arg9[%c0_57, %c0_58, %c0_59, %c0_60], %127 {strides = array<i32>} : memref<1x3x2x128xf32, #tpu.memory_space<vmem>>, vector<1x1x2x128xf32>,
    %cst_61 = arith.constant 0.0175070036 : f32
    %128 = vector.broadcast %cst_61 : f32 to vector<2x128xf32>
    %129 = arith.mulf %111, %128 : vector<2x128xf32>
    %cst_62 = arith.constant 2.03571439 : f32
    %130 = vector.broadcast %cst_62 : f32 to vector<2x128xf32>
    %131 = arith.subf %129, %130 : vector<2x128xf32>
    %c0_63 = arith.constant 0 : index
    %c1 = arith.constant 1 : index
    %c0_64 = arith.constant 0 : index
    %c0_65 = arith.constant 0 : index
    %132 = vector.load %arg9[%c0_63, %c1, %c0_64, %c0_65] : memref<1x3x2x128xf32, #tpu.memory_space<vmem>>, vector<1x1x2x128xf32>
    %133 = vector.shape_cast %132 : vector<1x1x2x128xf32> to vector<2x128xf32>
    %134 = vector.shape_cast %131 : vector<2x128xf32> to vector<1x1x2x128xf32>
    tpu.vector_store %arg9[%c0_63, %c1, %c0_64, %c0_65], %134 {strides = array<i32>} : memref<1x3x2x128xf32, #tpu.memory_space<vmem>>, vector<1x1x2x128xf32>,
    %cst_66 = arith.constant 0.0174291935 : f32
    %135 = vector.broadcast %cst_66 : f32 to vector<2x128xf32>
    %136 = arith.mulf %120, %135 : vector<2x128xf32>
    %cst_67 = arith.constant 1.80444443 : f32
    %137 = vector.broadcast %cst_67 : f32 to vector<2x128xf32>
    %138 = arith.subf %136, %137 : vector<2x128xf32>
    %c0_68 = arith.constant 0 : index
    %c2 = arith.constant 2 : index
    %c0_69 = arith.constant 0 : index
    %c0_70 = arith.constant 0 : index
    %139 = vector.load %arg9[%c0_68, %c2, %c0_69, %c0_70] : memref<1x3x2x128xf32, #tpu.memory_space<vmem>>, vector<1x1x2x128xf32>
    %140 = vector.shape_cast %139 : vector<1x1x2x128xf32> to vector<2x128xf32>
    %141 = vector.shape_cast %138 : vector<2x128xf32> to vector<1x1x2x128xf32>
    tpu.vector_store %arg9[%c0_68, %c2, %c0_69, %c0_70], %141 {strides = array<i32>} : memref<1x3x2x128xf32, #tpu.memory_space<vmem>>, vector<1x1x2x128xf32>,
    return
  }
  func.func @transform_0(%arg0: i32, %arg1: i32) -> (i32, i32, i32, i32) {
    %c0_i32 = arith.constant 0 : i32
    %c0_i32_0 = arith.constant 0 : i32
    %c0_i32_1 = arith.constant 0 : i32
    return %arg0, %c0_i32, %arg1, %c0_i32_0 : i32, i32, i32, i32
  }
  func.func @transform_1(%arg0: i32, %arg1: i32) -> (i32, i32) {
    %c0_i32 = arith.constant 0 : i32
    %c0_i32_0 = arith.constant 0 : i32
    %c0_i32_1 = arith.constant 0 : i32
    return %c0_i32, %c0_i32_0 : i32, i32
  }
  func.func @transform_2(%arg0: i32, %arg1: i32) -> (i32, i32) {
    %c0_i32 = arith.constant 0 : i32
    %c0_i32_0 = arith.constant 0 : i32
    %c0_i32_1 = arith.constant 0 : i32
    return %c0_i32, %c0_i32_0 : i32, i32
  }
  func.func @transform_3(%arg0: i32, %arg1: i32) -> (i32, i32) {
    %c0_i32 = arith.constant 0 : i32
    %c0_i32_0 = arith.constant 0 : i32
    %c0_i32_1 = arith.constant 0 : i32
    return %c0_i32, %c0_i32_0 : i32, i32
  }
  func.func @transform_4(%arg0: i32, %arg1: i32) -> (i32, i32) {
    %c0_i32 = arith.constant 0 : i32
    %c0_i32_0 = arith.constant 0 : i32
    %c0_i32_1 = arith.constant 0 : i32
    return %c0_i32, %c0_i32_0 : i32, i32
  }
  func.func @transform_5(%arg0: i32, %arg1: i32) -> (i32, i32) {
    %c0_i32 = arith.constant 0 : i32
    %c0_i32_0 = arith.constant 0 : i32
    %c0_i32_1 = arith.constant 0 : i32
    return %c0_i32, %c0_i32_0 : i32, i32
  }
  func.func @transform_6(%arg0: i32, %arg1: i32) -> (i32, i32) {
    %c0_i32 = arith.constant 0 : i32
    %c0_i32_0 = arith.constant 0 : i32
    %c0_i32_1 = arith.constant 0 : i32
    return %c0_i32, %c0_i32_0 : i32, i32
  }
  func.func @transform_7(%arg0: i32, %arg1: i32) -> (i32, i32, i32, i32) {
    %c0_i32 = arith.constant 0 : i32
    %c0_i32_0 = arith.constant 0 : i32
    %c0_i32_1 = arith.constant 0 : i32
    return %arg0, %c0_i32, %arg1, %c0_i32_0 : i32, i32, i32, i32
  }
}

</mosaic_0001>

<llo_original>
// kernel: tpu_custom_call.1
$region0: #{tpu_custom_call.1}
  #allocation0 [shape = 'u32[]', space=smem, size = 0x4, offset = 0x4, fixed_abs, tag = 'smem constant byte address 0x4 - core index']
  #allocation1 [shape = 'u32[72,128]{1,0:T(1,128)}', space=vmem, size = 0x9000, scoped, tag = 'internal scratch']
  %s0 = inlined_call_operand.hbm [shape: f32[2,3,2,128], index: 0, kind: input, shape index: {}]
  %s1 = inlined_call_operand.hbm [shape: bf16[128,128], index: 1, kind: input, shape index: {}]
  %s2 = inlined_call_operand.hbm [shape: bf16[128,128], index: 2, kind: input, shape index: {}]
  %s3 = inlined_call_operand.vmem [shape: f32[1,128], index: 3, kind: input, shape index: {}]
  %s4 = inlined_call_operand.vmem [shape: f32[1,128], index: 4, kind: input, shape index: {}]
  %s5 = inlined_call_operand.vmem [shape: f32[1,128], index: 5, kind: input, shape index: {}]
  %s6 = inlined_call_operand.vmem [shape: f32[1,128], index: 6, kind: input, shape index: {}]
  %s7 = inlined_call_operand.hbm [shape: f32[2,3,2,128], index: 7, kind: output, shape index: {}]
  %s8 = sld [smem:[#allocation0]]
  $region73: #{tpu_custom_call.1} parent=0
    _
  %s10 = ssub.s32 1, %s8
  %s11 = scalar_select 0, %s10, %s8
  $region1: #{tpu_custom_call.1} parent=0
    #allocation2 [shape = 'u8[6144]{0}', space=vmem, size = 0x1800, scoped, tag = 'input window, operand 0']
    #allocation3 [shape = 's32[2]{0}', space=sflag, size = 0x8, scoped, tag = 'scoped memory for tpu_custom_call.1']
    #allocation4 [shape = 's32[2]{0}', space=sflag, size = 0x8, scoped, tag = 'scoped memory for tpu_custom_call.1']
    #allocation5 [shape = 'u8[32768]{0}', space=vmem, size = 0x8000, scoped, tag = 'input window, operand 1, single buffered']
    #allocation6 [shape = 's32[1]{0}', space=sflag, size = 0x4, scoped, tag = 'scoped memory for tpu_custom_call.1']
    #allocation7 [shape = 'u8[32768]{0}', space=vmem, size = 0x8000, scoped, tag = 'input window, operand 2, single buffered']
    #allocation8 [shape = 'u8[6144]{0}', space=vmem, size = 0x1800, scoped, tag = 'output window, operand 0']
    %12 = vsyncpa [#allocation3], 0
    %s13 = scalar_lea.sflag [#allocation3], 1
    %14 = vsyncpa %s13, 0
    %15 = vsyncpa [#allocation6], 0
    %16 = vsyncpa [#allocation4], 0
    %s17 = scalar_lea.sflag [#allocation4], 1
    %18 = vsyncpa %s17, 0
    loop: start=0, step=1, limit=4
    $region2: #{tpu_custom_call.1} parent=1 // loop_pre_header
      _
    $region3: #{tpu_custom_call.1} parent=1 // loop_header
      %s20 = sphi 0, %s24
      %p21 = scmp.ge.s32.totalorder %s20, 4
      %s27 = sphi 0, %s39
      %s28 = sphi 0, %s35
      %s29 = sphi 0, %s27
      %s30 = sphi 0, %s28
      %s31 = sphi 0, %s29
      %s32 = sphi 0, %s30
      %s44 = sphi 0, %s46
      %s47 = sphi 0, %s44
      %s48 = sphi 0, %s47
      %s64 = sphi 0, %s48
      %s68 = sphi 0, %s68
      %s70 = sphi 0, %s68
      %s71 = sphi 0, %s70
      %s85 = sphi 0, %s71
      %s89 = sphi 0, %s89
      %s91 = sphi 0, %s89
      %s92 = sphi 0, %s91
      %s106 = sphi 0, %s92
      %s110 = sphi 0, %s110
      %s112 = sphi 0, %s110
      %s113 = sphi 0, %s112
      %s127 = sphi 0, %s113
      %s131 = sphi 0, %s131
      %s133 = sphi 0, %s131
      %s134 = sphi 0, %s133
      %s148 = sphi 0, %s134
      %s152 = sphi 0, %s152
      %s154 = sphi 0, %s152
      %s155 = sphi 0, %s154
      %s169 = sphi 0, %s155
      %s173 = sphi 0, %s173
      %s175 = sphi 0, %s173
      %s176 = sphi 0, %s175
      %s190 = sphi 0, %s176
      %s198 = sphi 0, %s200
      %s201 = sphi 0, %s198
      %s202 = sphi 0, %s201
      %s218 = sphi 0, %s202
    $region4: #{tpu_custom_call.1} parent=1 // loop_header_branch
      %23 = sbr.rel (%p21) target = $region8
    $region5: #{tpu_custom_call.1} parent=1 // loop_body
      %s25 = ssub.s32 %s20, 1
      %s26 = ssub.s32 %s20, 2
      %s33 = sadd.s32 1, %s28
      %p34 = scmp.ge.s32.totalorder %s33, 1
      %s35 = scalar_select %p34, 0, %s33
      %s36 = sadd.s32 1, %s27
      %s37 = scalar_select %p34, %s36, %s27
      %p38 = scmp.ge.s32.totalorder %s37, 2
      %s39 = scalar_select %p38, 0, %s37
      %s40 = ssub.s32 %s27, %s39
      %s41 = ssub.s32 %s28, %s35
      %s42 = sor.u32 %s40, %s41
      %p43 = scmp.eq.s32.totalorder %s42, 0
      %s45 = sadd.s32 %s44, 1
      %s46 = scalar_select %p43, %s44, %s45
      %p49 = pneg %p43
      %p50 = scmp.eq.s32.totalorder %s20, 1
      %p51 = por %p49, %p50
      %p52 = scmp.ne.s32.totalorder %s44, %s47
      %p53 = scmp.eq.s32.totalorder %s20, 0
      %p54 = por %p52, %p53
      %p55 = scmp.ne.s32.totalorder %s44, %s47
      %p56 = scmp.eq.s32.totalorder %s25, 1
      %p57 = por %p55, %p56
      %p58 = scmp.ne.s32.totalorder %s47, %s48
      %p59 = scmp.eq.s32.totalorder %s25, 0
      %p60 = por %p58, %p59
      %p61 = scmp.ne.s32.totalorder %s47, %s48
      %p62 = scmp.eq.s32.totalorder %s26, 1
      %p63 = por %p61, %p62
      %p65 = scmp.ne.s32.totalorder %s48, %s64
      %p66 = scmp.eq.s32.totalorder %s26, 0
      %p67 = por %p65, %p66
      %s69 = sadd.s32 %s68, 1
      %p72 = scmp.eq.s32.totalorder %s20, 1
      %p73 = scmp.ne.s32.totalorder %s68, %s70
      %p74 = scmp.eq.s32.totalorder %s20, 0
      %p75 = por %p73, %p74
      %p76 = scmp.ne.s32.totalorder %s68, %s70
      %p77 = scmp.eq.s32.totalorder %s25, 1
      %p78 = por %p76, %p77
      %p79 = scmp.ne.s32.totalorder %s70, %s71
      %p80 = scmp.eq.s32.totalorder %s25, 0
      %p81 = por %p79, %p80
      %p82 = scmp.ne.s32.totalorder %s70, %s71
      %p83 = scmp.eq.s32.totalorder %s26, 1
      %p84 = por %p82, %p83
      %p86 = scmp.ne.s32.totalorder %s71, %s85
      %p87 = scmp.eq.s32.totalorder %s26, 0
      %p88 = por %p86, %p87
      %s90 = sadd.s32 %s89, 1
      %p93 = scmp.eq.s32.totalorder %s20, 1
      %p94 = scmp.ne.s32.totalorder %s89, %s91
      %p95 = scmp.eq.s32.totalorder %s20, 0
      %p96 = por %p94, %p95
      %p97 = scmp.ne.s32.totalorder %s89, %s91
      %p98 = scmp.eq.s32.totalorder %s25, 1
      %p99 = por %p97, %p98
      %p100 = scmp.ne.s32.totalorder %s91, %s92
      %p101 = scmp.eq.s32.totalorder %s25, 0
      %p102 = por %p100, %p101
      %p103 = scmp.ne.s32.totalorder %s91, %s92
      %p104 = scmp.eq.s32.totalorder %s26, 1
      %p105 = por %p103, %p104
      %p107 = scmp.ne.s32.totalorder %s92, %s106
      %p108 = scmp.eq.s32.totalorder %s26, 0
      %p109 = por %p107, %p108
      %s111 = sadd.s32 %s110, 1
      %p114 = scmp.eq.s32.totalorder %s20, 1
      %p115 = scmp.ne.s32.totalorder %s110, %s112
      %p116 = scmp.eq.s32.totalorder %s20, 0
      %p117 = por %p115, %p116
      %p118 = scmp.ne.s32.totalorder %s110, %s112
      %p119 = scmp.eq.s32.totalorder %s25, 1
      %p120 = por %p118, %p119
      %p121 = scmp.ne.s32.totalorder %s112, %s113
      %p122 = scmp.eq.s32.totalorder %s25, 0
      %p123 = por %p121, %p122
      %p124 = scmp.ne.s32.totalorder %s112, %s113
      %p125 = scmp.eq.s32.totalorder %s26, 1
      %p126 = por %p124, %p125
      %p128 = scmp.ne.s32.totalorder %s113, %s127
      %p129 = scmp.eq.s32.totalorder %s26, 0
      %p130 = por %p128, %p129
      %s132 = sadd.s32 %s131, 1
      %p135 = scmp.eq.s32.totalorder %s20, 1
      %p136 = scmp.ne.s32.totalorder %s131, %s133
      %p137 = scmp.eq.s32.totalorder %s20, 0
      %p138 = por %p136, %p137
      %p139 = scmp.ne.s32.totalorder %s131, %s133
      %p140 = scmp.eq.s32.totalorder %s25, 1
      %p141 = por %p139, %p140
      %p142 = scmp.ne.s32.totalorder %s133, %s134
      %p143 = scmp.eq.s32.totalorder %s25, 0
      %p144 = por %p142, %p143
      %p145 = scmp.ne.s32.totalorder %s133, %s134
      %p146 = scmp.eq.s32.totalorder %s26, 1
      %p147 = por %p145, %p146
      %p149 = scmp.ne.s32.totalorder %s134, %s148
      %p150 = scmp.eq.s32.totalorder %s26, 0
      %p151 = por %p149, %p150
      %s153 = sadd.s32 %s152, 1
      %p156 = scmp.eq.s32.totalorder %s20, 1
      %p157 = scmp.ne.s32.totalorder %s152, %s154
      %p158 = scmp.eq.s32.totalorder %s20, 0
      %p159 = por %p157, %p158
      %p160 = scmp.ne.s32.totalorder %s152, %s154
      %p161 = scmp.eq.s32.totalorder %s25, 1
      %p162 = por %p160, %p161
      %p163 = scmp.ne.s32.totalorder %s154, %s155
      %p164 = scmp.eq.s32.totalorder %s25, 0
      %p165 = por %p163, %p164
      %p166 = scmp.ne.s32.totalorder %s154, %s155
      %p167 = scmp.eq.s32.totalorder %s26, 1
      %p168 = por %p166, %p167
      %p170 = scmp.ne.s32.totalorder %s155, %s169
      %p171 = scmp.eq.s32.totalorder %s26, 0
      %p172 = por %p170, %p171
      %s174 = sadd.s32 %s173, 1
      %p177 = scmp.eq.s32.totalorder %s20, 1
      %p178 = scmp.ne.s32.totalorder %s173, %s175
      %p179 = scmp.eq.s32.totalorder %s20, 0
      %p180 = por %p178, %p179
      %p181 = scmp.ne.s32.totalorder %s173, %s175
      %p182 = scmp.eq.s32.totalorder %s25, 1
      %p183 = por %p181, %p182
      %p184 = scmp.ne.s32.totalorder %s175, %s176
      %p185 = scmp.eq.s32.totalorder %s25, 0
      %p186 = por %p184, %p185
      %p187 = scmp.ne.s32.totalorder %s175, %s176
      %p188 = scmp.eq.s32.totalorder %s26, 1
      %p189 = por %p187, %p188
      %p191 = scmp.ne.s32.totalorder %s176, %s190
      %p192 = scmp.eq.s32.totalorder %s26, 0
      %p193 = por %p191, %p192
      %s194 = ssub.s32 %s27, %s39
      %s195 = ssub.s32 %s28, %s35
      %s196 = sor.u32 %s194, %s195
      %p197 = scmp.eq.s32.totalorder %s196, 0
      %s199 = sadd.s32 %s198, 1
      %s200 = scalar_select %p197, %s198, %s199
      %p203 = pneg %p197
      %p204 = scmp.eq.s32.totalorder %s20, 1
      %p205 = por %p203, %p204
      %p206 = scmp.ne.s32.totalorder %s198, %s201
      %p207 = scmp.eq.s32.totalorder %s20, 0
      %p208 = por %p206, %p207
      %p209 = scmp.ne.s32.totalorder %s198, %s201
      %p210 = scmp.eq.s32.totalorder %s25, 1
      %p211 = por %p209, %p210
      %p212 = scmp.ne.s32.totalorder %s201, %s202
      %p213 = scmp.eq.s32.totalorder %s25, 0
      %p214 = por %p212, %p213
      %p215 = scmp.ne.s32.totalorder %s201, %s202
      %p216 = scmp.eq.s32.totalorder %s26, 1
      %p217 = por %p215, %p216
      %p219 = scmp.ne.s32.totalorder %s202, %s218
      %p220 = scmp.eq.s32.totalorder %s26, 0
      %p221 = por %p219, %p220
      %p222 = scmp.le.s32.totalorder 1, %s20
      %p223 = scmp.lt.s32.totalorder %s20, 3
      %p224 = pnand %p222, %p223
      %p225 = pneg %p224
      // Predicated region
      $region9: #{tpu_custom_call.1} parent=5 // pred_check
        _
      $region10: #{tpu_custom_call.1} parent=5 // pred_check_branch
        %227 = sbr.rel (%p224) target = $region12
      $region11: #{tpu_custom_call.1} parent=5 // pred_region
        %s228 = ssub.s32 %s20, 1
        // Predicated region
        $region13: #{tpu_custom_call.1} parent=11 // pred_check
          %p229 = pneg %p81
        $region14: #{tpu_custom_call.1} parent=11 // pred_check_branch
          %231 = sbr.rel (%p229) target = $region16
        $region15: #{tpu_custom_call.1} parent=11 // pred_region
          %233 = vsyncadd [#allocation6], 0
          %s234 = sshll.u32 %s1, 4
          %s235 = int_to_ptr.hbm [resolvable:$true] %s234
          %s236 = sshll.u32 [#allocation5], 4
          %s237 = int_to_ptr.vmem [resolvable:$true] %s236
          %242 = dma.hbm_to_vmem [thread:$0]  %s235, 1024, %s237, [#allocation6], 64, 64, 4
        $region16: #{tpu_custom_call.1} parent=11 // pred_fallthru
          _
        // Predicated region
        $region17: #{tpu_custom_call.1} parent=11 // pred_check
          %p243 = pneg %p102
        $region18: #{tpu_custom_call.1} parent=11 // pred_check_branch
          %245 = sbr.rel (%p243) target = $region20
        $region19: #{tpu_custom_call.1} parent=11 // pred_region
          %247 = vsyncadd [#allocation6], 0
          %s248 = sshll.u32 %s2, 4
          %s249 = int_to_ptr.hbm [resolvable:$true] %s248
          %s250 = sshll.u32 [#allocation7], 4
          %s251 = int_to_ptr.vmem [resolvable:$true] %s250
          %256 = dma.hbm_to_vmem [thread:$0]  %s249, 1024, %s251, [#allocation6], 64, 64, 4
        $region20: #{tpu_custom_call.1} parent=11 // pred_fallthru
          _
        // Predicated region
        $region21: #{tpu_custom_call.1} parent=11 // pred_check
          %p257 = pneg %p123
        $region22: #{tpu_custom_call.1} parent=11 // pred_check_branch
          %259 = sbr.rel (%p257) target = $region24
        $region23: #{tpu_custom_call.1} parent=11 // pred_region
          _
        $region24: #{tpu_custom_call.1} parent=11 // pred_fallthru
          _
        // Predicated region
        $region25: #{tpu_custom_call.1} parent=11 // pred_check
          %p260 = pneg %p144
        $region26: #{tpu_custom_call.1} parent=11 // pred_check_branch
          %262 = sbr.rel (%p260) target = $region28
        $region27: #{tpu_custom_call.1} parent=11 // pred_region
          _
        $region28: #{tpu_custom_call.1} parent=11 // pred_fallthru
          _
        // Predicated region
        $region29: #{tpu_custom_call.1} parent=11 // pred_check
          %p263 = pneg %p165
        $region30: #{tpu_custom_call.1} parent=11 // pred_check_branch
          %265 = sbr.rel (%p263) target = $region32
        $region31: #{tpu_custom_call.1} parent=11 // pred_region
          _
        $region32: #{tpu_custom_call.1} parent=11 // pred_fallthru
          _
        // Predicated region
        $region33: #{tpu_custom_call.1} parent=11 // pred_check
          %p266 = pneg %p186
        $region34: #{tpu_custom_call.1} parent=11 // pred_check_branch
          %268 = sbr.rel (%p266) target = $region36
        $region35: #{tpu_custom_call.1} parent=11 // pred_region
          _
        $region36: #{tpu_custom_call.1} parent=11 // pred_fallthru
          _
      $region12: #{tpu_custom_call.1} parent=5 // pred_fallthru
        _
      %p269 = scmp.lt.s32.totalorder %s20, 2
      // Predicated region
      $region37: #{tpu_custom_call.1} parent=5 // pred_check
        %p270 = pneg %p269
      $region38: #{tpu_custom_call.1} parent=5 // pred_check_branch
        %272 = sbr.rel (%p270) target = $region40
      $region39: #{tpu_custom_call.1} parent=5 // pred_region
        // Predicated region
        $region41: #{tpu_custom_call.1} parent=39 // pred_check
          %p273 = pneg %p54
        $region42: #{tpu_custom_call.1} parent=39 // pred_check_branch
          %275 = sbr.rel (%p273) target = $region44
        $region43: #{tpu_custom_call.1} parent=39 // pred_region
          %s276 = sand.u32 %s44, 1
          %s277 = scalar_lea.sflag [#allocation3], %s276
          %s278 = sand.u32 %s44, 1
          %s279 = smul.addr %s278, 6
          %s280 = scalar_lea.vmem [#allocation2], %s279
          %282 = vsyncadd %s277, 0
          %s283 = smul.addr %s27, 3
          %s284 = sadd.s32 %s28, %s283
          %s285 = smul.addr %s284, 2
          %s286 = scalar_lea.hbm %s0, %s285
          %s287 = sshll.u32 %s286, 4
          %s288 = int_to_ptr.hbm [resolvable:$true] %s287
          %s289 = sshll.u32 %s280, 4
          %s290 = int_to_ptr.vmem [resolvable:$true] %s289
          %295 = dma.hbm_to_vmem [thread:$0]  %s288, 96, %s290, %s277, 32, 32, 2
        $region44: #{tpu_custom_call.1} parent=39 // pred_fallthru
          _
      $region40: #{tpu_custom_call.1} parent=5 // pred_fallthru
        _
      %p296 = scmp.le.s32.totalorder 1, %s20
      %p297 = scmp.lt.s32.totalorder %s20, 3
      %p298 = pnand %p296, %p297
      %p299 = pneg %p298
      // Predicated region
      $region45: #{tpu_custom_call.1} parent=5 // pred_check
        _
      $region46: #{tpu_custom_call.1} parent=5 // pred_check_branch
        %301 = sbr.rel (%p298) target = $region48
      $region47: #{tpu_custom_call.1} parent=5 // pred_region
        %s302 = ssub.s32 %s20, 1
        %s303 = sand.u32 %s47, 1
        %s304 = scalar_lea.sflag [#allocation3], %s303
        %s305 = sand.u32 %s47, 1
        %s306 = smul.addr %s305, 6
        %s307 = scalar_lea.vmem [#allocation2], %s306
        // Predicated region
        $region49: #{tpu_custom_call.1} parent=47 // pred_check
          %p308 = pneg %p60
        $region50: #{tpu_custom_call.1} parent=47 // pred_check_branch
          %310 = sbr.rel (%p308) target = $region52
        $region51: #{tpu_custom_call.1} parent=47 // pred_region
          %312 = dma.done %s304, 96
        $region52: #{tpu_custom_call.1} parent=47 // pred_fallthru
          _
        // Predicated region
        $region53: #{tpu_custom_call.1} parent=47 // pred_check
          %p313 = pneg %p81
        $region54: #{tpu_custom_call.1} parent=47 // pred_check_branch
          %315 = sbr.rel (%p313) target = $region56
        $region55: #{tpu_custom_call.1} parent=47 // pred_region
          %317 = dma.done [#allocation6], 1024
        $region56: #{tpu_custom_call.1} parent=47 // pred_fallthru
          _
        // Predicated region
        $region57: #{tpu_custom_call.1} parent=47 // pred_check
          %p318 = pneg %p102
        $region58: #{tpu_custom_call.1} parent=47 // pred_check_branch
          %320 = sbr.rel (%p318) target = $region60
        $region59: #{tpu_custom_call.1} parent=47 // pred_region
          %322 = dma.done [#allocation6], 1024
        $region60: #{tpu_custom_call.1} parent=47 // pred_fallthru
          _
        %s323 = sand.u32 %s47, 1
        %s324 = scalar_lea.sflag [#allocation3], %s323
        %s325 = sand.u32 %s47, 1
        %s326 = smul.addr %s325, 6
        %s327 = scalar_lea.vmem [#allocation2], %s326
        %p328 = pneg %p60
        %p329 = pneg %p57
        %p330 = pneg %p81
        %p331 = pneg %p78
        %p332 = pneg %p102
        %p333 = pneg %p99
        %p334 = pneg %p123
        %p335 = pneg %p120
        %p336 = pneg %p144
        %p337 = pneg %p141
        %p338 = pneg %p165
        %p339 = pneg %p162
        %p340 = pneg %p186
        %p341 = pneg %p183
        %p342 = pneg %p214
        %p343 = pneg %p211
        %s344 = sand.u32 %s201, 1
        %s345 = scalar_lea.sflag [#allocation4], %s344
        %s346 = sand.u32 %s201, 1
        %s347 = smul.addr %s346, 6
        %s348 = scalar_lea.vmem [#allocation8], %s347
        %v349 = vld [vmem:[%s307] sm:$0x3]
        %v350 = vld [vmem:[%s307 + $0x2] sm:$0x3]
        %v351 = vld [vmem:[%s307 + $0x4] sm:$0x3]
        %v352 = vld [vmem:[#allocation5] sm:$0xf]
        %v353 = vld [vmem:[#allocation5 + $0x4] sm:$0xf]
        %v354 = vld [vmem:[#allocation5 + $0x8] sm:$0xf]
        %v355 = vld [vmem:[#allocation5 + $0xc] sm:$0xf]
        %v356 = vld [vmem:[#allocation5 + $0x10] sm:$0xf]
        %v357 = vld [vmem:[#allocation5 + $0x14] sm:$0xf]
        %v358 = vld [vmem:[#allocation5 + $0x18] sm:$0xf]
        %v359 = vld [vmem:[#allocation5 + $0x1c] sm:$0xf]
        %v360 = vld [vmem:[#allocation5 + $0x20] sm:$0xf]
        %v361 = vld [vmem:[#allocation5 + $0x24] sm:$0xf]
        %v362 = vld [vmem:[#allocation5 + $0x28] sm:$0xf]
        %v363 = vld [vmem:[#allocation5 + $0x2c] sm:$0xf]
        %v364 = vld [vmem:[#allocation5 + $0x30] sm:$0xf]
        %v365 = vld [vmem:[#allocation5 + $0x34] sm:$0xf]
        %v366 = vld [vmem:[#allocation5 + $0x38] sm:$0xf]
        %v367 = vld [vmem:[#allocation5 + $0x3c] sm:$0xf]
        %v368 = vld [vmem:[#allocation7] sm:$0xf]
        %v369 = vld [vmem:[#allocation7 + $0x4] sm:$0xf]
        %v370 = vld [vmem:[#allocation7 + $0x8] sm:$0xf]
        %v371 = vld [vmem:[#allocation7 + $0xc] sm:$0xf]
        %v372 = vld [vmem:[#allocation7 + $0x10] sm:$0xf]
        %v373 = vld [vmem:[#allocation7 + $0x14] sm:$0xf]
        %v374 = vld [vmem:[#allocation7 + $0x18] sm:$0xf]
        %v375 = vld [vmem:[#allocation7 + $0x1c] sm:$0xf]
        %v376 = vld [vmem:[#allocation7 + $0x20] sm:$0xf]
        %v377 = vld [vmem:[#allocation7 + $0x24] sm:$0xf]
        %v378 = vld [vmem:[#allocation7 + $0x28] sm:$0xf]
        %v379 = vld [vmem:[#allocation7 + $0x2c] sm:$0xf]
        %v380 = vld [vmem:[#allocation7 + $0x30] sm:$0xf]
        %v381 = vld [vmem:[#allocation7 + $0x34] sm:$0xf]
        %v382 = vld [vmem:[#allocation7 + $0x38] sm:$0xf]
        %v383 = vld [vmem:[#allocation7 + $0x3c] sm:$0xf]
        %v384 = vld [vmem:[%s3] sm:$0x1]
        %v385 = vld [vmem:[%s4] sm:$0x1]
        %v386 = vld [vmem:[%s5] sm:$0x1]
        %v387 = vld [vmem:[%s6] sm:$0x1]
        %v388 = vmul.f32 %v349, 58.395
        %v389 = vadd.f32 %v388, 123.675
        %v390 = vmax.f32 %v389, 0.0
        %v391 = vmin.f32 %v390, 255.0
        %v392 = vmul.f32 %v350, 57.12
        %v393 = vadd.f32 %v392, 116.28
        %v394 = vmax.f32 %v393, 0.0
        %v395 = vmin.f32 %v394, 255.0
        %v396 = vmul.f32 %v351, 57.375
        %v397 = vadd.f32 %v396, 103.53
        %v398 = vmax.f32 %v397, 0.0
        %v399 = vmin.f32 %v398, 255.0
        %v400 = vmul.f32 %v391, 0.299
        %v401 = vmul.f32 %v395, 0.587
        %v402 = vadd.f32 %v400, %v401
        %v403 = vmul.f32 %v399, 0.114
        %v404 = vadd.f32 %v402, %v403
        %v405 = vsub.f32 %v404, 128.0
        %v406 = vmul.f32 %v391, -0.168736
        %v407 = vmul.f32 %v395, 0.331264
        %v408 = vsub.f32 %v406, %v407
        %v409 = vmul.f32 %v399, 0.5
        %v410 = vadd.f32 %v408, %v409
        %v411 = vmul.f32 %v391, 0.5
        %v412 = vmul.f32 %v395, 0.418688
        %v413 = vsub.f32 %v411, %v412
        %v414 = vmul.f32 %v399, 0.081312
        %v415 = vsub.f32 %v413, %v414
        %v416 = vpack.c.bf16 %v405, %v405
        %v433 = vunpack.c.l.b16 %v352
        %v434 = vunpack.c.l.b16 %v353
        %v435 = vunpack.c.l.b16 %v354
        %v436 = vunpack.c.l.b16 %v355
        %v437 = vunpack.c.l.b16 %v356
        %v438 = vunpack.c.l.b16 %v357
        %v439 = vunpack.c.l.b16 %v358
        %v440 = vunpack.c.l.b16 %v359
        %v441 = vunpack.c.l.b16 %v360
        %v442 = vunpack.c.l.b16 %v361
        %v443 = vunpack.c.l.b16 %v362
        %v444 = vunpack.c.l.b16 %v363
        %v445 = vunpack.c.l.b16 %v364
        %v446 = vunpack.c.l.b16 %v365
        %v447 = vunpack.c.l.b16 %v366
        %v448 = vunpack.c.l.b16 %v367
        %v449 = vpack.c.b16 %v434, %v433
        %v450 = vpack.c.b16 %v436, %v435
        %v451 = vpack.c.b16 %v438, %v437
        %v452 = vpack.c.b16 %v440, %v439
        %v453 = vpack.c.b16 %v442, %v441
        %v454 = vpack.c.b16 %v444, %v443
        %v455 = vpack.c.b16 %v446, %v445
        %v456 = vpack.c.b16 %v448, %v447
        %465 = vmatpush.bf16.msra.mxu0 %v456
        %466 = vmatpush.bf16.msra.mxu0 %v455
        %467 = vmatpush.bf16.msra.mxu0 %v454
        %468 = vmatpush.bf16.msra.mxu0 %v453
        %469 = vmatpush.bf16.msra.mxu0 %v452
        %470 = vmatpush.bf16.msra.mxu0 %v451
        %471 = vmatpush.bf16.msra.mxu0 %v450
        %472 = vmatpush.bf16.msra.mxu0 %v449
        %473 = vmatmul.bf16.gmra.mxu0 %v416
        %v474 = vpop.f32.mrf.mxu0
        %v475 = vadd.f32 0.0, %v474
        %v476 = vpop.f32.mrf.mxu0
        %477 = vdwg.mxu0
        %v479 = vperm.slane %v385, 0
        %v481 = vmul.f32 %v475, %v479
        %v482 = vround.ne.pseudo %v481
        %v484 = vperm.slane %v384, 0
        %v486 = vmul.f32 %v482, %v484
        %v487 = vpack.c.bf16 %v486, %v486
        %v504 = vunpack.c.l.b16 %v368
        %v505 = vunpack.c.l.b16 %v369
        %v506 = vunpack.c.l.b16 %v370
        %v507 = vunpack.c.l.b16 %v371
        %v508 = vunpack.c.l.b16 %v372
        %v509 = vunpack.c.l.b16 %v373
        %v510 = vunpack.c.l.b16 %v374
        %v511 = vunpack.c.l.b16 %v375
        %v512 = vunpack.c.l.b16 %v376
        %v513 = vunpack.c.l.b16 %v377
        %v514 = vunpack.c.l.b16 %v378
        %v515 = vunpack.c.l.b16 %v379
        %v516 = vunpack.c.l.b16 %v380
        %v517 = vunpack.c.l.b16 %v381
        %v518 = vunpack.c.l.b16 %v382
        %v519 = vunpack.c.l.b16 %v383
        %v520 = vpack.c.b16 %v505, %v504
        %v521 = vpack.c.b16 %v507, %v506
        %v522 = vpack.c.b16 %v509, %v508
        %v523 = vpack.c.b16 %v511, %v510
        %v524 = vpack.c.b16 %v513, %v512
        %v525 = vpack.c.b16 %v515, %v514
        %v526 = vpack.c.b16 %v517, %v516
        %v527 = vpack.c.b16 %v519, %v518
        %536 = vmatpush.bf16.msra.mxu0 %v527
        %537 = vmatpush.bf16.msra.mxu0 %v526
        %538 = vmatpush.bf16.msra.mxu0 %v525
        %539 = vmatpush.bf16.msra.mxu0 %v524
        %540 = vmatpush.bf16.msra.mxu0 %v523
        %541 = vmatpush.bf16.msra.mxu0 %v522
        %542 = vmatpush.bf16.msra.mxu0 %v521
        %543 = vmatpush.bf16.msra.mxu0 %v520
        %544 = vmatmul.bf16.gmra.mxu0 %v487
        %v545 = vpop.f32.mrf.mxu0
        %v546 = vadd.f32 0.0, %v545
        %v547 = vpop.f32.mrf.mxu0
        %548 = vdwg.mxu0
        %v549 = vpack.c.bf16 %v410, %v410
        %550 = vmatpush.bf16.msra.mxu0 %v456
        %551 = vmatpush.bf16.msra.mxu0 %v455
        %552 = vmatpush.bf16.msra.mxu0 %v454
        %553 = vmatpush.bf16.msra.mxu0 %v453
        %554 = vmatpush.bf16.msra.mxu0 %v452
        %555 = vmatpush.bf16.msra.mxu0 %v451
        %556 = vmatpush.bf16.msra.mxu0 %v450
        %557 = vmatpush.bf16.msra.mxu0 %v449
        %558 = vmatmul.bf16.gmra.mxu0 %v549
        %v559 = vpop.f32.mrf.mxu0
        %v560 = vadd.f32 0.0, %v559
        %v561 = vpop.f32.mrf.mxu0
        %562 = vdwg.mxu0
        %v564 = vperm.slane %v387, 0
        %v566 = vmul.f32 %v560, %v564
        %v567 = vround.ne.pseudo %v566
        %v569 = vperm.slane %v386, 0
        %v571 = vmul.f32 %v567, %v569
        %v572 = vpack.c.bf16 %v571, %v571
        %573 = vmatpush.bf16.msra.mxu0 %v527
        %574 = vmatpush.bf16.msra.mxu0 %v526
        %575 = vmatpush.bf16.msra.mxu0 %v525
        %576 = vmatpush.bf16.msra.mxu0 %v524
        %577 = vmatpush.bf16.msra.mxu0 %v523
        %578 = vmatpush.bf16.msra.mxu0 %v522
        %579 = vmatpush.bf16.msra.mxu0 %v521
        %580 = vmatpush.bf16.msra.mxu0 %v520
        %581 = vmatmul.bf16.gmra.mxu0 %v572
        %v582 = vpop.f32.mrf.mxu0
        %v583 = vadd.f32 0.0, %v582
        %v584 = vpop.f32.mrf.mxu0
        %585 = vdwg.mxu0
        %v586 = vpack.c.bf16 %v415, %v415
        %587 = vmatpush.bf16.msra.mxu0 %v456
        %588 = vmatpush.bf16.msra.mxu0 %v455
        %589 = vmatpush.bf16.msra.mxu0 %v454
        %590 = vmatpush.bf16.msra.mxu0 %v453
        %591 = vmatpush.bf16.msra.mxu0 %v452
        %592 = vmatpush.bf16.msra.mxu0 %v451
        %593 = vmatpush.bf16.msra.mxu0 %v450
        %594 = vmatpush.bf16.msra.mxu0 %v449
        %595 = vmatmul.bf16.gmra.mxu0 %v586
        %v596 = vpop.f32.mrf.mxu0
        %v597 = vadd.f32 0.0, %v596
        %v598 = vpop.f32.mrf.mxu0
        %599 = vdwg.mxu0
        %v600 = vmul.f32 %v597, %v564
        %v601 = vround.ne.pseudo %v600
        %v602 = vmul.f32 %v601, %v569
        %v603 = vpack.c.bf16 %v602, %v602
        %604 = vmatpush.bf16.msra.mxu0 %v527
        %605 = vmatpush.bf16.msra.mxu0 %v526
        %606 = vmatpush.bf16.msra.mxu0 %v525
        %607 = vmatpush.bf16.msra.mxu0 %v524
        %608 = vmatpush.bf16.msra.mxu0 %v523
        %609 = vmatpush.bf16.msra.mxu0 %v522
        %610 = vmatpush.bf16.msra.mxu0 %v521
        %611 = vmatpush.bf16.msra.mxu0 %v520
        %612 = vmatmul.bf16.gmra.mxu0 %v603
        %v613 = vpop.f32.mrf.mxu0
        %v614 = vadd.f32 0.0, %v613
        %v615 = vpop.f32.mrf.mxu0
        %616 = vdwg.mxu0
        %v617 = vmul.f32 %v614, 1.402
        %v618 = vadd.f32 %v546, %v617
        %v619 = vadd.f32 %v618, 128.0
        %v620 = vmax.f32 %v619, 0.0
        %v621 = vmin.f32 %v620, 255.0
        %v622 = vmul.f32 %v583, 0.344136
        %v623 = vsub.f32 %v546, %v622
        %v624 = vmul.f32 %v614, 0.714136
        %v625 = vsub.f32 %v623, %v624
        %v626 = vadd.f32 %v625, 128.0
        %v627 = vmax.f32 %v626, 0.0
        %v628 = vmin.f32 %v627, 255.0
        %v629 = vmul.f32 %v583, 1.772
        %v630 = vadd.f32 %v546, %v629
        %v631 = vadd.f32 %v630, 128.0
        %v632 = vmax.f32 %v631, 0.0
        %v633 = vmin.f32 %v632, 255.0
        %v634 = vmul.f32 %v621, 0.017124753
        %v635 = vsub.f32 %v634, 2.117904
        %636 = vst [vmem:[%s348] sm:$0x3] %v635
        %v637 = vmul.f32 %v628, 0.017507004
        %v638 = vsub.f32 %v637, 2.0357144
        %s639 = scalar_lea.vmem %s348, 2 [#allocation8]
        %640 = vst [vmem:[%s639] sm:$0x3] %v638
        %v641 = vmul.f32 %v633, 0.017429193
        %v642 = vsub.f32 %v641, 1.8044444
        %s643 = scalar_lea.vmem %s348, 4 [#allocation8]
        %644 = vst [vmem:[%s643] sm:$0x3] %v642
        %s645 = sand.u32 %s201, 1
        %s646 = scalar_lea.sflag [#allocation4], %s645
        %s647 = sand.u32 %s201, 1
        %s648 = smul.addr %s647, 6
        %s649 = scalar_lea.vmem [#allocation8], %s648
        // Predicated region
        $region61: #{tpu_custom_call.1} parent=47 // pred_check
          %p650 = pneg %p211
        $region62: #{tpu_custom_call.1} parent=47 // pred_check_branch
          %652 = sbr.rel (%p650) target = $region64
        $region63: #{tpu_custom_call.1} parent=47 // pred_region
          %654 = vsyncadd %s646, 0
          %s655 = smul.addr %s29, 3
          %s656 = sadd.s32 %s30, %s655
          %s657 = smul.addr %s656, 2
          %s658 = scalar_lea.hbm %s7, %s657
          %s659 = sshll.u32 %s649, 4
          %s660 = int_to_ptr.vmem [resolvable:$true] %s659
          %s661 = sshll.u32 %s658, 4
          %s662 = int_to_ptr.hbm [resolvable:$true] %s661
          %667 = dma.vmem_to_hbm [thread:$0]  %s660, 96, %s662, %s646, 32, 32, 2
        $region64: #{tpu_custom_call.1} parent=47 // pred_fallthru
          _
      $region48: #{tpu_custom_call.1} parent=5 // pred_fallthru
        _
      %p668 = scmp.le.s32.totalorder 2, %s20
      // Predicated region
      $region65: #{tpu_custom_call.1} parent=5 // pred_check
        %p669 = pneg %p668
      $region66: #{tpu_custom_call.1} parent=5 // pred_check_branch
        %671 = sbr.rel (%p669) target = $region68
      $region67: #{tpu_custom_call.1} parent=5 // pred_region
        %s672 = ssub.s32 %s20, 2
        // Predicated region
        $region69: #{tpu_custom_call.1} parent=67 // pred_check
          %p673 = pneg %p217
        $region70: #{tpu_custom_call.1} parent=67 // pred_check_branch
          %675 = sbr.rel (%p673) target = $region72
        $region71: #{tpu_custom_call.1} parent=67 // pred_region
          %s676 = sand.u32 %s202, 1
          %s677 = scalar_lea.sflag [#allocation4], %s676
          %s678 = sand.u32 %s202, 1
          %s679 = smul.addr %s678, 6
          %s680 = scalar_lea.vmem [#allocation8], %s679
          %682 = dma.done %s677, 96
        $region72: #{tpu_custom_call.1} parent=67 // pred_fallthru
          _
      $region68: #{tpu_custom_call.1} parent=5 // pred_fallthru
        _
    $region6: #{tpu_custom_call.1} parent=1 // loop_footer
      %s24 = sadd.s32 1, %s20
    $region7: #{tpu_custom_call.1} parent=1 // loop_footer_branch
      %19 = sbr.rel target = $region3
    $region8: #{tpu_custom_call.1} parent=1 // loop_exit
      _
    %683 = vsyncpa [#allocation3], 1
    %s684 = scalar_lea.sflag [#allocation3], 1
    %685 = vsyncpa %s684, 1
    %686 = vsyncpa [#allocation6], 1
    %687 = vsyncpa [#allocation4], 1
    %s688 = scalar_lea.sflag [#allocation4], 1
    %689 = vsyncpa %s688, 1

</llo_original>
